<compile_context>
chip_gen: v7x
topology: tpu7x:2x2x1
jax: 0.10.0
libtpu: 0.0.40
codegen_flags: <defaults>
</compile_context>

<pallas_src>
import functools

import jax
import jax.numpy as jnp
from jax.experimental import pallas as pl
from jax.experimental.pallas import tpu as pltpu


# ---------------------------------------------------------------------------
# Pallas kernel: whole inception block for a batch tile, fully VMEM-resident.
# ---------------------------------------------------------------------------
def _inception_kernel(x_ref, w_ref, b_ref, o_ref, patches_ref, *, L, C_in, Bt):
    # x_ref block: (Bt, C_in, L) — unpadded, lane dim exactly L.
    neg = jnp.finfo(jnp.float32).min
    lane = jax.lax.broadcasted_iota(jnp.int32, (C_in, L), 1)
    m_ge1 = lane >= 1          # valid region of a right-shift-by-1 tap
    m_ge2 = lane >= 2          # valid region of a right-shift-by-2 tap
    m_lt1 = lane < L - 1       # valid region of a left-shift-by-1 tap
    m_lt2 = lane < L - 2       # valid region of a left-shift-by-2 tap

    for b in range(Bt):        # Bt is tiny (== B here); fully unrolled
        xb = x_ref[b].astype(jnp.float32)                 # (C_in, L)
        # XLU lane rotations (free relative to VPU); shifts kept non-negative.
        r_p1 = pltpu.roll(xb, 1, axis=1)                  # -> x[:, l-1] (wraps at l=0)
        r_p2 = pltpu.roll(xb, 2, axis=1)                  # -> x[:, l-2]
        r_m1 = pltpu.roll(xb, (L - 1) % L, axis=1)        # -> x[:, l+1] (wraps at l=L-1)
        r_m2 = pltpu.roll(xb, (L - 2) % L, axis=1)        # -> x[:, l+2]

        col = slice(b * L, (b + 1) * L)
        # Five taps of the k=5, pad=2 window (branch3 all 5, branch2 taps 1..3,
        # branch1 the center tap) — zero edges == conv zero padding.
        patches_ref[0 * C_in:1 * C_in, col] = jnp.where(m_ge2, r_p2, 0.0)
        patches_ref[1 * C_in:2 * C_in, col] = jnp.where(m_ge1, r_p1, 0.0)
        patches_ref[2 * C_in:3 * C_in, col] = xb
        patches_ref[3 * C_in:4 * C_in, col] = jnp.where(m_lt1, r_m1, 0.0)
        patches_ref[4 * C_in:5 * C_in, col] = jnp.where(m_lt2, r_m2, 0.0)
        # Branch-4 MaxPool1d(kernel=3, stride=1, padding=1): -FLT_MAX at the edges so
        # the pool ignores the padding (matches PyTorch's -inf pool pad).
        patches_ref[5 * C_in:6 * C_in, col] = jnp.maximum(
            xb, jnp.maximum(jnp.where(m_ge1, r_p1, neg),
                            jnp.where(m_lt1, r_m1, neg)))

    # One MXU GEMM emits the channel-concatenated output of all four branches,
    # with N = Bt*L lane-dense columns.
    y = jnp.dot(w_ref[...], patches_ref[...], preferred_element_type=jnp.float32)
    y = jnp.maximum(y + b_ref[...], 0.0)                  # bias + ReLU epilogue in f32
    for b in range(Bt):
        o_ref[b] = y[:, b * L:(b + 1) * L].astype(o_ref.dtype)


# ---------------------------------------------------------------------------
# Parameter prep (runs ONCE, outside the forward hot path).
# ---------------------------------------------------------------------------
def make_fused_params(params):
    """Fold the four branch conv weights into one block-sparse fused GEMM weight.

    Column layout matches the in-kernel patches slab: columns k*C_in:(k+1)*C_in are
    tap k of the k=5/pad=2 window (tap 2 == unshifted x); columns 5*C_in: are the
    3-wide max-pooled activations.
    """
    w1, b1 = params["b1_w"], params["b1_b"]   # (o1, C_in, 1)
    w2, b2 = params["b2_w"], params["b2_b"]   # (o3, C_in, 3)
    w3, b3 = params["b3_w"], params["b3_b"]   # (o5, C_in, 5)
    w4, b4 = params["b4_w"], params["b4_b"]   # (o4, C_in, 1)
    C_in = w1.shape[1]

    def place_taps(w, tap_offset):
        # (O, C_in, K) -> (O, 5*C_in): tap k, channel c lands at column
        # (tap_offset + k) * C_in + c of the fused 5-tap window.
        out_c, _, k = w.shape
        wt = jnp.transpose(w, (0, 2, 1)).reshape(out_c, k * C_in)
        left = tap_offset * C_in
        right = 5 * C_in - left - k * C_in
        return jnp.pad(wt, ((0, 0), (left, right)))

    zc = lambda o: jnp.zeros((o, C_in), jnp.float32)
    w_b1 = jnp.concatenate([place_taps(w1, 2), zc(w1.shape[0])], axis=1)   # center tap
    w_b2 = jnp.concatenate([place_taps(w2, 1), zc(w2.shape[0])], axis=1)   # taps 1..3
    w_b3 = jnp.concatenate([place_taps(w3, 0), zc(w3.shape[0])], axis=1)   # taps 0..4
    w_b4 = jnp.concatenate(
        [jnp.zeros((w4.shape[0], 5 * C_in), jnp.float32), w4[:, :, 0]], axis=1)
    w_big = jnp.concatenate([w_b1, w_b2, w_b3, w_b4], axis=0).astype(jnp.float32)
    bias = jnp.concatenate([b1, b2, b3, b4]).reshape(-1, 1).astype(jnp.float32)
    return w_big, bias                                     # (out_total, 6*C_in), (out_total, 1)


# ---------------------------------------------------------------------------
# Forward: exactly one pallas_call on the hot path.
# ---------------------------------------------------------------------------
def naive_inception_block(x, w_big, bias, *, batch_block=None):
    """x: (B, C_in, L) in PyTorch NCL layout. Returns (B, out_total, L)."""
    B, C_in, L = x.shape
    out_total, k_big = w_big.shape
    assert k_big == 6 * C_in
    Bt = B if batch_block is None else batch_block
    assert B % Bt == 0

    kernel = functools.partial(_inception_kernel, L=L, C_in=C_in, Bt=Bt)
    return pl.pallas_call(
        kernel,
        out_shape=jax.ShapeDtypeStruct((B, out_total, L), jnp.float32),
        grid=(B // Bt,),
        in_specs=[
            pl.BlockSpec((Bt, C_in, L), lambda i: (i, 0, 0)),
            pl.BlockSpec((out_total, k_big), lambda i: (0, 0)),   # VMEM-resident weight
            pl.BlockSpec((out_total, 1), lambda i: (0, 0)),       # VMEM-resident bias
        ],
        out_specs=pl.BlockSpec((Bt, out_total, L), lambda i: (i, 0, 0)),
        scratch_shapes=[pltpu.VMEM((k_big, Bt * L), jnp.float32)],
        compiler_params=pltpu.CompilerParams(dimension_semantics=("parallel",)),
    )(x, w_big, bias)


# ---------------------------------------------------------------------------
# Pure-JAX reference (mirrors the PyTorch forward) for the correctness check.
# ---------------------------------------------------------------------------
def ref_forward(x, params):
    def conv_relu(inp, w, b, pad):
        y = jax.lax.conv_general_dilated(
            inp, w, window_strides=(1,), padding=[(pad, pad)],
            dimension_numbers=("NCH", "OIH", "NCH"))
        return jnp.maximum(y + b[None, :, None], 0.0)

    L = x.shape[-1]
    r1 = conv_relu(x, params["b1_w"], params["b1_b"], 0)
    r2 = conv_relu(x, params["b2_w"], params["b2_b"], 1)
    r3 = conv_relu(x, params["b3_w"], params["b3_b"], 2)
    xp = jnp.pad(x, ((0, 0), (0, 0), (1, 1)), constant_values=-jnp.inf)
    pooled = jnp.maximum(jnp.maximum(xp[:, :, 0:L], xp[:, :, 1:L + 1]), xp[:, :, 2:L + 2])
    r4 = conv_relu(pooled, params["b4_w"], params["b4_b"], 0)
    return jnp.concatenate([r1, r2, r3, r4], axis=1)


if __name__ == "__main__":
    # Naive_inception_block(16, 8, 8, 8, 8) — the configuration the network uses.
    B, C_in, L = 2, 16, 128
    o1 = o3 = o5 = o4 = 8

    key = jax.random.PRNGKey(0)
    ks = jax.random.split(key, 9)

    def winit(k, shape, fan_in):
        bound = 1.0 / jnp.sqrt(jnp.float32(fan_in))
        return jax.random.uniform(k, shape, jnp.float32, -bound, bound)

    params = {
        "b1_w": winit(ks[0], (o1, C_in, 1), C_in * 1),
        "b1_b": winit(ks[1], (o1,), C_in * 1),
        "b2_w": winit(ks[2], (o3, C_in, 3), C_in * 3),
        "b2_b": winit(ks[3], (o3,), C_in * 3),
        "b3_w": winit(ks[4], (o5, C_in, 5), C_in * 5),
        "b3_b": winit(ks[5], (o5,), C_in * 5),
        "b4_w": winit(ks[6], (o4, C_in, 1), C_in * 1),
        "b4_b": winit(ks[7], (o4,), C_in * 1),
    }
    x = jax.random.normal(ks[8], (B, C_in, L), dtype=jnp.float32)

    # Fused weight/bias built ONCE (hoisted out of the per-call forward).
    w_big, bias = jax.block_until_ready(make_fused_params(params))

    fwd = jax.jit(naive_inception_block)
    out = jax.block_until_ready(fwd(x, w_big, bias))

    ref = ref_forward(x, params)
    assert out.shape == (B, o1 + o3 + o5 + o4, L)
    assert bool(jnp.all(jnp.isfinite(out)))
    assert bool(jnp.max(jnp.abs(out - ref)) < 1e-4)
    print("KERNEL_OK")
</pallas_src>

<mosaic_0001>
module attributes {stable_mosaic.version = 11 : i64} {
  func.func @_inception_kernel(%arg0: i32, %arg1: memref<2x16x128xf32, #tpu.memory_space<vmem>>, %arg2: memref<32x96xf32, #tpu.memory_space<vmem>>, %arg3: memref<32x1xf32, #tpu.memory_space<vmem>>, %arg4: memref<2x32x128xf32, #tpu.memory_space<vmem>>, %arg5: memref<96x256xf32, #tpu.memory_space<vmem>>) attributes {dimension_semantics = [#tpu.dimension_semantics<parallel>], iteration_bounds = array<i64: 1>, scalar_prefetch = 0 : i64, scratch_operands = 1 : i64, tpu.core_type = #tpu.core_type<tc>, window_params = [{transform_indices = @transform_0, window_bounds = array<i64: 2, 16, 128>}, {pipeline_mode = #tpu.pipeline_mode<synchronous>, transform_indices = @transform_1, window_bounds = array<i64: 32, 96>}, {pipeline_mode = #tpu.pipeline_mode<synchronous>, transform_indices = @transform_2, window_bounds = array<i64: 32, 1>}, {transform_indices = @transform_3, window_bounds = array<i64: 2, 32, 128>}]} {
    %0 = tpu.iota {dimensions = array<i32: 1>} : vector<16x128xi32>
    %c1_i32 = arith.constant 1 : i32
    %1 = vector.broadcast %c1_i32 : i32 to vector<16x128xi32>
    %2 = arith.cmpi sge, %0, %1 : vector<16x128xi32>
    %c2_i32 = arith.constant 2 : i32
    %3 = vector.broadcast %c2_i32 : i32 to vector<16x128xi32>
    %4 = arith.cmpi sge, %0, %3 : vector<16x128xi32>
    %c127_i32 = arith.constant 127 : i32
    %5 = vector.broadcast %c127_i32 : i32 to vector<16x128xi32>
    %6 = arith.cmpi slt, %0, %5 : vector<16x128xi32>
    %c126_i32 = arith.constant 126 : i32
    %7 = vector.broadcast %c126_i32 : i32 to vector<16x128xi32>
    %8 = arith.cmpi slt, %0, %7 : vector<16x128xi32>
    %c0 = arith.constant 0 : index
    %c0_0 = arith.constant 0 : index
    %c0_1 = arith.constant 0 : index
    %9 = vector.load %arg1[%c0, %c0_0, %c0_1] : memref<2x16x128xf32, #tpu.memory_space<vmem>>, vector<1x16x128xf32>
    %10 = vector.shape_cast %9 : vector<1x16x128xf32> to vector<16x128xf32>
    %c1_i32_2 = arith.constant 1 : i32
    %11 = tpu.dynamic_rotate %10 by %c1_i32_2 dim 1 : vector<16x128xf32>, i32 -> vector<16x128xf32>
    %c2_i32_3 = arith.constant 2 : i32
    %12 = tpu.dynamic_rotate %10 by %c2_i32_3 dim 1 : vector<16x128xf32>, i32 -> vector<16x128xf32>
    %c127_i32_4 = arith.constant 127 : i32
    %13 = tpu.dynamic_rotate %10 by %c127_i32_4 dim 1 : vector<16x128xf32>, i32 -> vector<16x128xf32>
    %c126_i32_5 = arith.constant 126 : i32
    %14 = tpu.dynamic_rotate %10 by %c126_i32_5 dim 1 : vector<16x128xf32>, i32 -> vector<16x128xf32>
    %cst = arith.constant 0.000000e+00 : f32
    %15 = vector.broadcast %cst : f32 to vector<16x128xf32>
    %16 = arith.select %4, %12, %15 : vector<16x128xi1>, vector<16x128xf32>
    %c0_6 = arith.constant 0 : index
    %c0_7 = arith.constant 0 : index
    %17 = vector.load %arg5[%c0_6, %c0_7] : memref<96x256xf32, #tpu.memory_space<vmem>>, vector<16x128xf32>
    tpu.vector_store %arg5[%c0_6, %c0_7], %16 {strides = array<i32>} : memref<96x256xf32, #tpu.memory_space<vmem>>, vector<16x128xf32>,
    %cst_8 = arith.constant 0.000000e+00 : f32
    %18 = vector.broadcast %cst_8 : f32 to vector<16x128xf32>
    %19 = arith.select %2, %11, %18 : vector<16x128xi1>, vector<16x128xf32>
    %c16 = arith.constant 16 : index
    %c0_9 = arith.constant 0 : index
    %20 = vector.load %arg5[%c16, %c0_9] : memref<96x256xf32, #tpu.memory_space<vmem>>, vector<16x128xf32>
    tpu.vector_store %arg5[%c16, %c0_9], %19 {strides = array<i32>} : memref<96x256xf32, #tpu.memory_space<vmem>>, vector<16x128xf32>,
    %c32 = arith.constant 32 : index
    %c0_10 = arith.constant 0 : index
    %21 = vector.load %arg5[%c32, %c0_10] : memref<96x256xf32, #tpu.memory_space<vmem>>, vector<16x128xf32>
    tpu.vector_store %arg5[%c32, %c0_10], %10 {strides = array<i32>} : memref<96x256xf32, #tpu.memory_space<vmem>>, vector<16x128xf32>,
    %cst_11 = arith.constant 0.000000e+00 : f32
    %22 = vector.broadcast %cst_11 : f32 to vector<16x128xf32>
    %23 = arith.select %6, %13, %22 : vector<16x128xi1>, vector<16x128xf32>
    %c48 = arith.constant 48 : index
    %c0_12 = arith.constant 0 : index
    %24 = vector.load %arg5[%c48, %c0_12] : memref<96x256xf32, #tpu.memory_space<vmem>>, vector<16x128xf32>
    tpu.vector_store %arg5[%c48, %c0_12], %23 {strides = array<i32>} : memref<96x256xf32, #tpu.memory_space<vmem>>, vector<16x128xf32>,
    %cst_13 = arith.constant 0.000000e+00 : f32
    %25 = vector.broadcast %cst_13 : f32 to vector<16x128xf32>
    %26 = arith.select %8, %14, %25 : vector<16x128xi1>, vector<16x128xf32>
    %c64 = arith.constant 64 : index
    %c0_14 = arith.constant 0 : index
    %27 = vector.load %arg5[%c64, %c0_14] : memref<96x256xf32, #tpu.memory_space<vmem>>, vector<16x128xf32>
    tpu.vector_store %arg5[%c64, %c0_14], %26 {strides = array<i32>} : memref<96x256xf32, #tpu.memory_space<vmem>>, vector<16x128xf32>,
    %cst_15 = arith.constant -3.40282347E+38 : f32
    %28 = vector.broadcast %cst_15 : f32 to vector<16x128xf32>
    %29 = arith.select %2, %11, %28 : vector<16x128xi1>, vector<16x128xf32>
    %cst_16 = arith.constant -3.40282347E+38 : f32
    %30 = vector.broadcast %cst_16 : f32 to vector<16x128xf32>
    %31 = arith.select %6, %13, %30 : vector<16x128xi1>, vector<16x128xf32>
    %32 = arith.maximumf %29, %31 : vector<16x128xf32>
    %33 = arith.maximumf %10, %32 : vector<16x128xf32>
    %c80 = arith.constant 80 : index
    %c0_17 = arith.constant 0 : index
    %34 = vector.load %arg5[%c80, %c0_17] : memref<96x256xf32, #tpu.memory_space<vmem>>, vector<16x128xf32>
    tpu.vector_store %arg5[%c80, %c0_17], %33 {strides = array<i32>} : memref<96x256xf32, #tpu.memory_space<vmem>>, vector<16x128xf32>,
    %c1 = arith.constant 1 : index
    %c0_18 = arith.constant 0 : index
    %c0_19 = arith.constant 0 : index
    %35 = vector.load %arg1[%c1, %c0_18, %c0_19] : memref<2x16x128xf32, #tpu.memory_space<vmem>>, vector<1x16x128xf32>
    %36 = vector.shape_cast %35 : vector<1x16x128xf32> to vector<16x128xf32>
    %c1_i32_20 = arith.constant 1 : i32
    %37 = tpu.dynamic_rotate %36 by %c1_i32_20 dim 1 : vector<16x128xf32>, i32 -> vector<16x128xf32>
    %c2_i32_21 = arith.constant 2 : i32
    %38 = tpu.dynamic_rotate %36 by %c2_i32_21 dim 1 : vector<16x128xf32>, i32 -> vector<16x128xf32>
    %c127_i32_22 = arith.constant 127 : i32
    %39 = tpu.dynamic_rotate %36 by %c127_i32_22 dim 1 : vector<16x128xf32>, i32 -> vector<16x128xf32>
    %c126_i32_23 = arith.constant 126 : i32
    %40 = tpu.dynamic_rotate %36 by %c126_i32_23 dim 1 : vector<16x128xf32>, i32 -> vector<16x128xf32>
    %cst_24 = arith.constant 0.000000e+00 : f32
    %41 = vector.broadcast %cst_24 : f32 to vector<16x128xf32>
    %42 = arith.select %4, %38, %41 : vector<16x128xi1>, vector<16x128xf32>
    %c0_25 = arith.constant 0 : index
    %c128 = arith.constant 128 : index
    %43 = vector.load %arg5[%c0_25, %c128] : memref<96x256xf32, #tpu.memory_space<vmem>>, vector<16x128xf32>
    tpu.vector_store %arg5[%c0_25, %c128], %42 {strides = array<i32>} : memref<96x256xf32, #tpu.memory_space<vmem>>, vector<16x128xf32>,
    %cst_26 = arith.constant 0.000000e+00 : f32
    %44 = vector.broadcast %cst_26 : f32 to vector<16x128xf32>
    %45 = arith.select %2, %37, %44 : vector<16x128xi1>, vector<16x128xf32>
    %c16_27 = arith.constant 16 : index
    %c128_28 = arith.constant 128 : index
    %46 = vector.load %arg5[%c16_27, %c128_28] : memref<96x256xf32, #tpu.memory_space<vmem>>, vector<16x128xf32>
    tpu.vector_store %arg5[%c16_27, %c128_28], %45 {strides = array<i32>} : memref<96x256xf32, #tpu.memory_space<vmem>>, vector<16x128xf32>,
    %c32_29 = arith.constant 32 : index
    %c128_30 = arith.constant 128 : index
    %47 = vector.load %arg5[%c32_29, %c128_30] : memref<96x256xf32, #tpu.memory_space<vmem>>, vector<16x128xf32>
    tpu.vector_store %arg5[%c32_29, %c128_30], %36 {strides = array<i32>} : memref<96x256xf32, #tpu.memory_space<vmem>>, vector<16x128xf32>,
    %cst_31 = arith.constant 0.000000e+00 : f32
    %48 = vector.broadcast %cst_31 : f32 to vector<16x128xf32>
    %49 = arith.select %6, %39, %48 : vector<16x128xi1>, vector<16x128xf32>
    %c48_32 = arith.constant 48 : index
    %c128_33 = arith.constant 128 : index
    %50 = vector.load %arg5[%c48_32, %c128_33] : memref<96x256xf32, #tpu.memory_space<vmem>>, vector<16x128xf32>
    tpu.vector_store %arg5[%c48_32, %c128_33], %49 {strides = array<i32>} : memref<96x256xf32, #tpu.memory_space<vmem>>, vector<16x128xf32>,
    %cst_34 = arith.constant 0.000000e+00 : f32
    %51 = vector.broadcast %cst_34 : f32 to vector<16x128xf32>
    %52 = arith.select %8, %40, %51 : vector<16x128xi1>, vector<16x128xf32>
    %c64_35 = arith.constant 64 : index
    %c128_36 = arith.constant 128 : index
    %53 = vector.load %arg5[%c64_35, %c128_36] : memref<96x256xf32, #tpu.memory_space<vmem>>, vector<16x128xf32>
    tpu.vector_store %arg5[%c64_35, %c128_36], %52 {strides = array<i32>} : memref<96x256xf32, #tpu.memory_space<vmem>>, vector<16x128xf32>,
    %cst_37 = arith.constant -3.40282347E+38 : f32
    %54 = vector.broadcast %cst_37 : f32 to vector<16x128xf32>
    %55 = arith.select %2, %37, %54 : vector<16x128xi1>, vector<16x128xf32>
    %cst_38 = arith.constant -3.40282347E+38 : f32
    %56 = vector.broadcast %cst_38 : f32 to vector<16x128xf32>
    %57 = arith.select %6, %39, %56 : vector<16x128xi1>, vector<16x128xf32>
    %58 = arith.maximumf %55, %57 : vector<16x128xf32>
    %59 = arith.maximumf %36, %58 : vector<16x128xf32>
    %c80_39 = arith.constant 80 : index
    %c128_40 = arith.constant 128 : index
    %60 = vector.load %arg5[%c80_39, %c128_40] : memref<96x256xf32, #tpu.memory_space<vmem>>, vector<16x128xf32>
    tpu.vector_store %arg5[%c80_39, %c128_40], %59 {strides = array<i32>} : memref<96x256xf32, #tpu.memory_space<vmem>>, vector<16x128xf32>,
    %c0_41 = arith.constant 0 : index
    %c0_42 = arith.constant 0 : index
    %61 = vector.load %arg2[%c0_41, %c0_42] : memref<32x96xf32, #tpu.memory_space<vmem>>, vector<32x96xf32>
    %c0_43 = arith.constant 0 : index
    %c0_44 = arith.constant 0 : index
    %62 = vector.load %arg5[%c0_43, %c0_44] : memref<96x256xf32, #tpu.memory_space<vmem>>, vector<96x256xf32>
    %cst_45 = arith.constant dense<0.000000e+00> : vector<32x256xf32>
    %63 = tpu.matmul %61, %62, %cst_45 {dimension_numbers = #tpu.dot_dimension_numbers<[1], [0], [0], [1], [0, 0, 1, 1], [], []>} : vector<32x96xf32>, vector<96x256xf32>, vector<32x256xf32> -> vector<32x256xf32>
    %c0_46 = arith.constant 0 : index
    %c0_47 = arith.constant 0 : index
    %64 = vector.load %arg3[%c0_46, %c0_47] : memref<32x1xf32, #tpu.memory_space<vmem>>, vector<32x1xf32>
    %65 = vector.broadcast %64 : vector<32x1xf32> to vector<32x256xf32>
    %66 = arith.addf %63, %65 : vector<32x256xf32>
    %cst_48 = arith.constant 0.000000e+00 : f32
    %67 = vector.broadcast %cst_48 : f32 to vector<32x256xf32>
    %68 = arith.maximumf %66, %67 : vector<32x256xf32>
    %69 = vector.extract_strided_slice %68 {offsets = [0, 0], sizes = [32, 128], strides = [1, 1]} : vector<32x256xf32> to vector<32x128xf32>
    %c0_49 = arith.constant 0 : index
    %c0_50 = arith.constant 0 : index
    %c0_51 = arith.constant 0 : index
    %70 = vector.load %arg4[%c0_49, %c0_50, %c0_51] : memref<2x32x128xf32, #tpu.memory_space<vmem>>, vector<1x32x128xf32>
    %71 = vector.shape_cast %70 : vector<1x32x128xf32> to vector<32x128xf32>
    %72 = vector.shape_cast %69 : vector<32x128xf32> to vector<1x32x128xf32>
    tpu.vector_store %arg4[%c0_49, %c0_50, %c0_51], %72 {strides = array<i32>} : memref<2x32x128xf32, #tpu.memory_space<vmem>>, vector<1x32x128xf32>,
    %73 = vector.extract_strided_slice %68 {offsets = [0, 128], sizes = [32, 128], strides = [1, 1]} : vector<32x256xf32> to vector<32x128xf32>
    %c1_52 = arith.constant 1 : index
    %c0_53 = arith.constant 0 : index
    %c0_54 = arith.constant 0 : index
    %74 = vector.load %arg4[%c1_52, %c0_53, %c0_54] : memref<2x32x128xf32, #tpu.memory_space<vmem>>, vector<1x32x128xf32>
    %75 = vector.shape_cast %74 : vector<1x32x128xf32> to vector<32x128xf32>
    %76 = vector.shape_cast %73 : vector<32x128xf32> to vector<1x32x128xf32>
    tpu.vector_store %arg4[%c1_52, %c0_53, %c0_54], %76 {strides = array<i32>} : memref<2x32x128xf32, #tpu.memory_space<vmem>>, vector<1x32x128xf32>,
    return
  }
  func.func @transform_0(%arg0: i32) -> (i32, i32, i32) {
    %c0_i32 = arith.constant 0 : i32
    %c0_i32_0 = arith.constant 0 : i32
    %c0_i32_1 = arith.constant 0 : i32
    return %arg0, %c0_i32, %c0_i32_0 : i32, i32, i32
  }
  func.func @transform_1(%arg0: i32) -> (i32, i32) {
    %c0_i32 = arith.constant 0 : i32
    %c0_i32_0 = arith.constant 0 : i32
    %c0_i32_1 = arith.constant 0 : i32
    return %c0_i32, %c0_i32_0 : i32, i32
  }
  func.func @transform_2(%arg0: i32) -> (i32, i32) {
    %c0_i32 = arith.constant 0 : i32
    %c0_i32_0 = arith.constant 0 : i32
    %c0_i32_1 = arith.constant 0 : i32
    return %c0_i32, %c0_i32_0 : i32, i32
  }
  func.func @transform_3(%arg0: i32) -> (i32, i32, i32) {
    %c0_i32 = arith.constant 0 : i32
    %c0_i32_0 = arith.constant 0 : i32
    %c0_i32_1 = arith.constant 0 : i32
    return %arg0, %c0_i32, %c0_i32_0 : i32, i32, i32
  }
}

</mosaic_0001>

<llo_original>
// kernel: naive_inception_block.1
$region0: #{naive_inception_block.1}
  #allocation0 [shape = 'u32[]', space=smem, size = 0x4, offset = 0x4, fixed_abs, tag = 'smem constant byte address 0x4 - core index']
  #allocation1 [shape = 'u32[144,128]{1,0:T(1,128)}', space=vmem, size = 0x12000, scoped, tag = 'internal scratch']
  #allocation2 [shape = 'f32[96,256]{1,0:T(8,128)}', space=vmem, size = 0x18000, scoped, tag = 'scratch operand']
  %s0 = inlined_call_operand.vmem [shape: f32[2,16,128], index: 0, kind: input, shape index: {}]
  %s1 = inlined_call_operand.hbm [shape: f32[32,96], index: 1, kind: input, shape index: {}]
  %s2 = inlined_call_operand.vmem [shape: f32[32,1], index: 2, kind: input, shape index: {}]
  %s3 = inlined_call_operand.hbm [shape: f32[2,32,128], index: 3, kind: output, shape index: {}]
  %s4 = sld [smem:[#allocation0]]
  $region26: #{naive_inception_block.1} parent=0
    _
  %s6 = ssub.s32 1, %s4
  %s7 = scalar_select 0, %s6, %s4
  $region1: #{naive_inception_block.1} parent=0
    #allocation3 [shape = 'u8[16384]{0}', space=vmem, size = 0x4000, scoped, tag = 'input window, operand 1, single buffered']
    #allocation4 [shape = 's32[1]{0}', space=sflag, size = 0x4, scoped, tag = 'scoped memory for naive_inception_block.1']
    #allocation5 [shape = 's32[1]{0}', space=sflag, size = 0x4, scoped, tag = 'scoped memory for naive_inception_block.1']
    #allocation6 [shape = 'u8[32768]{0}', space=vmem, size = 0x8000, scoped, tag = 'output window, operand 0, single buffered']
    %8 = vsyncpa [#allocation4], 0
    %9 = vsyncpa [#allocation5], 0
    // Predicated region
    $region2: #{naive_inception_block.1} parent=1 // pred_check
      _
    $region3: #{naive_inception_block.1} parent=1 // pred_check_branch
      %11 = sbr.rel (0) target = $region5
    $region4: #{naive_inception_block.1} parent=1 // pred_region
      _
    $region5: #{naive_inception_block.1} parent=1 // pred_fallthru
      _
    // Predicated region
    $region6: #{naive_inception_block.1} parent=1 // pred_check
      _
    $region7: #{naive_inception_block.1} parent=1 // pred_check_branch
      %13 = sbr.rel (0) target = $region9
    $region8: #{naive_inception_block.1} parent=1 // pred_region
      %s15 = ssub.s32 512, 512
      %16 = vsyncadd [#allocation4], %s15
      %s17 = sshll.u32 [#allocation3], 4
      %s18 = int_to_ptr.vmem [resolvable:$true] %s17
      %23 = dma.hbm_to_vmem [thread:$0]  %s1, 512, %s18, [#allocation4], 128, 128, 8
    $region9: #{naive_inception_block.1} parent=1 // pred_fallthru
      _
    // Predicated region
    $region10: #{naive_inception_block.1} parent=1 // pred_check
      _
    $region11: #{naive_inception_block.1} parent=1 // pred_check_branch
      %25 = sbr.rel (0) target = $region13
    $region12: #{naive_inception_block.1} parent=1 // pred_region
      _
    $region13: #{naive_inception_block.1} parent=1 // pred_fallthru
      _
    // Predicated region
    $region14: #{naive_inception_block.1} parent=1 // pred_check
      _
    $region15: #{naive_inception_block.1} parent=1 // pred_check_branch
      %27 = sbr.rel (0) target = $region17
    $region16: #{naive_inception_block.1} parent=1 // pred_region
      %28 = dma.done [#allocation4], 512
    $region17: #{naive_inception_block.1} parent=1 // pred_fallthru
      _
    %v29 = vlaneseq
    %v30 = vand.u32 %v29, 127
    %vm31 = vcmp.ge.s32.totalorder %v30, 1
    %vm32 = vcmp.ge.s32.totalorder %v30, 2
    %vm33 = vcmp.lt.s32.totalorder %v30, 127
    %vm34 = vcmp.lt.s32.totalorder %v30, 126
    %v35 = vld [vmem:[%s0] sm:$0xff]
    %v36 = vld [vmem:[%s0 + $0x8] sm:$0xff]
    %37 = vrot.lane.b32.xlu0 %v35, 1
    %v38 = vpop.permute.xlu0 %37
    %39 = vrot.lane.b32.xlu0 %v36, 1
    %v40 = vpop.permute.xlu0 %39
    %41 = vrot.lane.b32.xlu0 %v35, 2
    %v42 = vpop.permute.xlu0 %41
    %43 = vrot.lane.b32.xlu0 %v36, 2
    %v44 = vpop.permute.xlu0 %43
    %45 = vrot.lane.b32.xlu0 %v35, 127
    %v46 = vpop.permute.xlu0 %45
    %47 = vrot.lane.b32.xlu0 %v36, 127
    %v48 = vpop.permute.xlu0 %47
    %49 = vrot.lane.b32.xlu0 %v35, 126
    %v50 = vpop.permute.xlu0 %49
    %51 = vrot.lane.b32.xlu0 %v36, 126
    %v52 = vpop.permute.xlu0 %51
    %v53 = vsel %vm32, %v42, 0.0
    %v54 = vsel %vm32, %v44, 0.0
    %55 = vst [vmem:[#allocation2] sm:$0xff] %v53
    %56 = vst [vmem:[#allocation2 + $0x10] sm:$0xff] %v54
    %v57 = vsel %vm31, %v38, 0.0
    %v58 = vsel %vm31, %v40, 0.0
    %59 = vst [vmem:[#allocation2 + $0x20] sm:$0xff] %v57
    %60 = vst [vmem:[#allocation2 + $0x30] sm:$0xff] %v58
    %61 = vst [vmem:[#allocation2 + $0x40] sm:$0xff] %v35
    %62 = vst [vmem:[#allocation2 + $0x50] sm:$0xff] %v36
    %v63 = vsel %vm33, %v46, 0.0
    %v64 = vsel %vm33, %v48, 0.0
    %65 = vst [vmem:[#allocation2 + $0x60] sm:$0xff] %v63
    %66 = vst [vmem:[#allocation2 + $0x70] sm:$0xff] %v64
    %v67 = vsel %vm34, %v50, 0.0
    %v68 = vsel %vm34, %v52, 0.0
    %69 = vst [vmem:[#allocation2 + $0x80] sm:$0xff] %v67
    %70 = vst [vmem:[#allocation2 + $0x90] sm:$0xff] %v68
    %v71 = vsel %vm31, %v38, -3.4028235e+38
    %v72 = vsel %vm31, %v40, -3.4028235e+38
    %v73 = vsel %vm33, %v46, -3.4028235e+38
    %v74 = vsel %vm33, %v48, -3.4028235e+38
    %v75 = vmax.f32 %v71, %v73
    %v76 = vmax.f32 %v72, %v74
    %v77 = vmax.f32 %v35, %v75
    %v78 = vmax.f32 %v36, %v76
    %79 = vst [vmem:[#allocation2 + $0xa0] sm:$0xff] %v77
    %80 = vst [vmem:[#allocation2 + $0xb0] sm:$0xff] %v78
    %s81 = scalar_lea.vmem %s0, 16
    %v82 = vld [vmem:[%s81] sm:$0xff]
    %v83 = vld [vmem:[%s81 + $0x8] sm:$0xff]
    %84 = vrot.lane.b32.xlu0 %v82, 1
    %v85 = vpop.permute.xlu0 %84
    %86 = vrot.lane.b32.xlu0 %v83, 1
    %v87 = vpop.permute.xlu0 %86
    %88 = vrot.lane.b32.xlu0 %v82, 2
    %v89 = vpop.permute.xlu0 %88
    %90 = vrot.lane.b32.xlu0 %v83, 2
    %v91 = vpop.permute.xlu0 %90
    %92 = vrot.lane.b32.xlu0 %v82, 127
    %v93 = vpop.permute.xlu0 %92
    %94 = vrot.lane.b32.xlu0 %v83, 127
    %v95 = vpop.permute.xlu0 %94
    %96 = vrot.lane.b32.xlu0 %v82, 126
    %v97 = vpop.permute.xlu0 %96
    %98 = vrot.lane.b32.xlu0 %v83, 126
    %v99 = vpop.permute.xlu0 %98
    %v100 = vsel %vm32, %v89, 0.0
    %v101 = vsel %vm32, %v91, 0.0
    %102 = vst [vmem:[#allocation2 + $0x8] sm:$0xff] %v100
    %103 = vst [vmem:[#allocation2 + $0x18] sm:$0xff] %v101
    %v104 = vsel %vm31, %v85, 0.0
    %v105 = vsel %vm31, %v87, 0.0
    %106 = vst [vmem:[#allocation2 + $0x28] sm:$0xff] %v104
    %107 = vst [vmem:[#allocation2 + $0x38] sm:$0xff] %v105
    %108 = vst [vmem:[#allocation2 + $0x48] sm:$0xff] %v82
    %109 = vst [vmem:[#allocation2 + $0x58] sm:$0xff] %v83
    %v110 = vsel %vm33, %v93, 0.0
    %v111 = vsel %vm33, %v95, 0.0
    %112 = vst [vmem:[#allocation2 + $0x68] sm:$0xff] %v110
    %113 = vst [vmem:[#allocation2 + $0x78] sm:$0xff] %v111
    %v114 = vsel %vm34, %v97, 0.0
    %v115 = vsel %vm34, %v99, 0.0
    %116 = vst [vmem:[#allocation2 + $0x88] sm:$0xff] %v114
    %117 = vst [vmem:[#allocation2 + $0x98] sm:$0xff] %v115
    %v118 = vsel %vm31, %v85, -3.4028235e+38
    %v119 = vsel %vm31, %v87, -3.4028235e+38
    %v120 = vsel %vm33, %v93, -3.4028235e+38
    %v121 = vsel %vm33, %v95, -3.4028235e+38
    %v122 = vmax.f32 %v118, %v120
    %v123 = vmax.f32 %v119, %v121
    %v124 = vmax.f32 %v82, %v122
    %v125 = vmax.f32 %v83, %v123
    %126 = vst [vmem:[#allocation2 + $0xa8] sm:$0xff] %v124
    %127 = vst [vmem:[#allocation2 + $0xb8] sm:$0xff] %v125
    %v128 = vld [vmem:[#allocation3] sm:$0xff]
    %v129 = vld [vmem:[#allocation3 + $0x8] sm:$0xff]
    %v130 = vld [vmem:[#allocation3 + $0x10] sm:$0xff]
    %v131 = vld [vmem:[#allocation3 + $0x18] sm:$0xff]
    %v132 = vld [vmem:[#allocation2] sm:$0xff]
    %v133 = vld [vmem:[#allocation2 + $0x8] sm:$0xff]
    %v134 = vld [vmem:[#allocation2 + $0x10] sm:$0xff]
    %v135 = vld [vmem:[#allocation2 + $0x18] sm:$0xff]
    %v136 = vld [vmem:[#allocation2 + $0x20] sm:$0xff]
    %v137 = vld [vmem:[#allocation2 + $0x28] sm:$0xff]
    %v138 = vld [vmem:[#allocation2 + $0x30] sm:$0xff]
    %v139 = vld [vmem:[#allocation2 + $0x38] sm:$0xff]
    %v140 = vld [vmem:[#allocation2 + $0x40] sm:$0xff]
    %v141 = vld [vmem:[#allocation2 + $0x48] sm:$0xff]
    %v142 = vld [vmem:[#allocation2 + $0x50] sm:$0xff]
    %v143 = vld [vmem:[#allocation2 + $0x58] sm:$0xff]
    %v144 = vld [vmem:[#allocation2 + $0x60] sm:$0xff]
    %v145 = vld [vmem:[#allocation2 + $0x68] sm:$0xff]
    %v146 = vld [vmem:[#allocation2 + $0x70] sm:$0xff]
    %v147 = vld [vmem:[#allocation2 + $0x78] sm:$0xff]
    %v148 = vld [vmem:[#allocation2 + $0x80] sm:$0xff]
    %v149 = vld [vmem:[#allocation2 + $0x88] sm:$0xff]
    %v150 = vld [vmem:[#allocation2 + $0x90] sm:$0xff]
    %v151 = vld [vmem:[#allocation2 + $0x98] sm:$0xff]
    %v152 = vld [vmem:[#allocation2 + $0xa0] sm:$0xff]
    %v153 = vld [vmem:[#allocation2 + $0xa8] sm:$0xff]
    %v154 = vld [vmem:[#allocation2 + $0xb0] sm:$0xff]
    %v155 = vld [vmem:[#allocation2 + $0xb8] sm:$0xff]
    %v156 = vld [vmem:[%s2] sm:$0xff]
    %v157 = vld [vmem:[%s2 + $0x8] sm:$0xff]
    %v158 = vld [vmem:[%s2 + $0x10] sm:$0xff]
    %v159 = vld [vmem:[%s2 + $0x18] sm:$0xff]
    %161 = vset.pattern.permute.xlu0 0
    %162 = vperm.xlu0 %161, %v156
    %v163 = vpop.permute.xlu0 %162
    %166 = vset.pattern.permute.xlu0 0
    %167 = vperm.xlu0 %166, %v157
    %v168 = vpop.permute.xlu0 %167
    %171 = vset.pattern.permute.xlu0 0
    %172 = vperm.xlu0 %171, %v158
    %v173 = vpop.permute.xlu0 %172
    %176 = vset.pattern.permute.xlu0 0
    %177 = vperm.xlu0 %176, %v159
    %v178 = vpop.permute.xlu0 %177
    %vm180 = vcmask 785408
    %v182 = vsel %vm180, %v128, 0
    %v185 = vsel %vm180, %v129, 0
    %v188 = vsel %vm180, %v130, 0
    %v191 = vsel %vm180, %v131, 0
    %193 = vmatprep.subr.mxu0 %v133
    %194 = vmatpush1.msra.mxu0 %v132
    %195 = vmatprep.subr.mxu0 %v135
    %196 = vmatpush1.msra.mxu0 %v134
    %197 = vmatprep.subr.mxu0 %v137
    %198 = vmatpush1.msra.mxu0 %v136
    %199 = vmatprep.subr.mxu0 %v139
    %200 = vmatpush1.msra.mxu0 %v138
    %201 = vmatprep.subr.mxu0 %v141
    %202 = vmatpush1.msra.mxu0 %v140
    %203 = vmatprep.subr.mxu0 %v143
    %204 = vmatpush1.msra.mxu0 %v142
    %205 = vmatprep.subr.mxu0 %v145
    %206 = vmatpush1.msra.mxu0 %v144
    %207 = vmatprep.subr.mxu0 %v147
    %208 = vmatpush1.msra.mxu0 %v146
    %209 = vmatprep.subr.mxu0 %v149
    %210 = vmatpush1.msra.mxu0 %v148
    %211 = vmatprep.subr.mxu0 %v151
    %212 = vmatpush1.msra.mxu0 %v150
    %213 = vmatprep.subr.mxu0 %v153
    %214 = vmatpush1.msra.mxu0 %v152
    %215 = vmatprep.subr.mxu0 %v155
    %216 = vmatpush1.msra.mxu0 %v154
    %217 = vmatprep.subr.mxu0 0.0
    %218 = vmatpush1.msra.mxu0 0.0
    %219 = vmatprep.subr.mxu0 0.0
    %220 = vmatpush1.msra.mxu0 0.0
    %221 = vmatprep.subr.mxu0 0.0
    %222 = vmatpush1.msra.mxu0 0.0
    %223 = vmatprep.subr.mxu0 0.0
    %224 = vmatpush1.msra.mxu0 0.0
    %225 = vmatprep.subr.mxu0 0.0
    %226 = vmatpush1.msra.mxu0 0.0
    %227 = vmatprep.subr.mxu0 0.0
    %228 = vmatpush1.msra.mxu0 0.0
    %229 = vmatprep.subr.mxu0 0.0
    %230 = vmatpush1.msra.mxu0 0.0
    %231 = vmatprep.subr.mxu0 0.0
    %232 = vmatpush1.msra.mxu0 0.0
    %233 = vmatprep.subr.mxu0 0.0
    %234 = vmatpush1.msra.mxu0 0.0
    %235 = vmatprep.subr.mxu0 0.0
    %236 = vmatpush1.msra.mxu0 0.0
    %237 = vmatprep.subr.mxu0 0.0
    %238 = vmatpush1.msra.mxu0 0.0
    %239 = vmatprep.subr.mxu0 0.0
    %240 = vmatpush1.msra.mxu0 0.0
    %241 = vmatprep.subr.mxu0 0.0
    %242 = vmatpush1.msra.mxu0 0.0
    %243 = vmatprep.subr.mxu0 0.0
    %244 = vmatpush1.msra.mxu0 0.0
    %245 = vmatprep.subr.mxu0 0.0
    %246 = vmatpush1.msra.mxu0 0.0
    %247 = vmatprep.subr.mxu0 0.0
    %248 = vmatpush1.msra.mxu0 0.0
    %249 = vmatprep.subr.mxu0 0.0
    %250 = vmatpush1.msra.mxu0 0.0
    %251 = vmatprep.subr.mxu0 0.0
    %252 = vmatpush1.msra.mxu0 0.0
    %253 = vmatprep.subr.mxu0 0.0
    %254 = vmatpush1.msra.mxu0 0.0
    %255 = vmatprep.subr.mxu0 0.0
    %256 = vmatpush1.msra.mxu0 0.0
    %257 = vmatprep.mubr.f32.mxu0 0.0
    %258 = vmatmul.mubr.f32.gmra.mrb[0].mxu0 %v182
    %v259 = vpop.f32.mrb[0].mxu0
    %v260 = vadd.f32 %v163, %v259
    %v261 = vpop.f32.mrb[0].mxu0
    %v262 = vadd.f32 %v163, %v261
    %263 = vmatprep.mubr.f32.mxu0 0.0
    %264 = vmatmul.mubr.f32.gmra.mrb[0].mxu0 %v185
    %v265 = vpop.f32.mrb[0].mxu0
    %v266 = vadd.f32 %v168, %v265
    %v267 = vpop.f32.mrb[0].mxu0
    %v268 = vadd.f32 %v168, %v267
    %269 = vmatprep.mubr.f32.mxu0 0.0
    %270 = vmatmul.mubr.f32.gmra.mrb[0].mxu0 %v188
    %v271 = vpop.f32.mrb[0].mxu0
    %v272 = vadd.f32 %v173, %v271
    %v273 = vpop.f32.mrb[0].mxu0
    %v274 = vadd.f32 %v173, %v273
    %275 = vmatprep.mubr.f32.mxu0 0.0
    %276 = vmatmul.mubr.f32.gmra.mrb[0].mxu0 %v191
    %v277 = vpop.f32.mrb[0].mxu0
    %v278 = vadd.f32 %v178, %v277
    %v279 = vpop.f32.mrb[0].mxu0
    %v280 = vadd.f32 %v178, %v279
    %281 = vdwg.mxu0
    %v282 = vmax.f32 %v260, 0.0
    %v283 = vmax.f32 %v262, 0.0
    %v284 = vmax.f32 %v266, 0.0
    %v285 = vmax.f32 %v268, 0.0
    %v286 = vmax.f32 %v272, 0.0
    %v287 = vmax.f32 %v274, 0.0
    %v288 = vmax.f32 %v278, 0.0
    %v289 = vmax.f32 %v280, 0.0
    %290 = vst [vmem:[#allocation6] sm:$0xff] %v282
    %291 = vst [vmem:[#allocation6 + $0x8] sm:$0xff] %v284
    %292 = vst [vmem:[#allocation6 + $0x10] sm:$0xff] %v286
    %293 = vst [vmem:[#allocation6 + $0x18] sm:$0xff] %v288
    %s294 = scalar_lea.vmem [#allocation6], 32
    %295 = vst [vmem:[%s294] sm:$0xff] %v283
    %296 = vst [vmem:[%s294 + $0x8] sm:$0xff] %v285
    %297 = vst [vmem:[%s294 + $0x10] sm:$0xff] %v287
    %298 = vst [vmem:[%s294 + $0x18] sm:$0xff] %v289
    // Predicated region
    $region18: #{naive_inception_block.1} parent=1 // pred_check
      _
    $region19: #{naive_inception_block.1} parent=1 // pred_check_branch
      %300 = sbr.rel (0) target = $region21
    $region20: #{naive_inception_block.1} parent=1 // pred_region
      %s302 = ssub.s32 1024, 1024
      %303 = vsyncadd [#allocation5], %s302
      %s304 = sshll.u32 [#allocation6], 4
      %s305 = int_to_ptr.vmem [resolvable:$true] %s304
      %310 = dma.vmem_to_hbm [thread:$0]  %s305, 1024, %s3, [#allocation5], 128, 128, 8
    $region21: #{naive_inception_block.1} parent=1 // pred_fallthru
      _
    // Predicated region
    $region22: #{naive_inception_block.1} parent=1 // pred_check
      _
    $region23: #{naive_inception_block.1} parent=1 // pred_check_branch
      %312 = sbr.rel (0) target = $region25
    $region24: #{naive_inception_block.1} parent=1 // pred_region
      %313 = dma.done [#allocation5], 1024
    $region25: #{naive_inception_block.1} parent=1 // pred_fallthru
      _
    %314 = vsyncpa [#allocation4], 1
    %315 = vsyncpa [#allocation5], 1

</llo_original>
